<compile_context>
chip_gen: v5e
topology: v5e:2x2
jax: 0.10.0
libtpu: 0.0.40
codegen_flags: <defaults>
</compile_context>

<pallas_src>
import numpy as np
import jax
import jax.numpy as jnp
from jax.experimental import pallas as pl
from jax.experimental.pallas import tpu as pltpu


# ----------------------------- config ---------------------------------------
BATCH = 2
SEQ = 8
HIDDEN = 32            # config.hidden_size
NUM_HEADS = 4          # config.num_attention_heads
EXPAND_K = 1.0
EXPAND_V = 2.0
KEY_DIM = int(HIDDEN * EXPAND_K)      # 32
VALUE_DIM = int(HIDDEN * EXPAND_V)    # 64
HEAD_QK = KEY_DIM // NUM_HEADS        # 8
HEAD_V = VALUE_DIM // NUM_HEADS       # 16
INTERMEDIATE = 64      # config.intermediate_size
RMS_EPS = 1e-6         # config.rms_norm_eps
GNORM_EPS = 1e-5       # fla FusedRMSNormSwishGate eps
ROPE_BASE = 10000.0

T = BATCH * SEQ        # flattened tokens


# ------------------------------ kernel --------------------------------------
def decoder_kernel(x_ref, wproj_ref, tok_ref, kvmask_ref, opack_ref,
                   wdown_ref, out_ref):
    KD, VD, H, I = KEY_DIM, VALUE_DIM, NUM_HEADS, INTERMEDIATE

    x = x_ref[...]                                   # (T, D)
    wproj = wproj_ref[...]                           # (D, 4*KD + 2*VD + 2*I)
    tok = tok_ref[...]                               # (T, 2*KD + H*T)
    kvm = kvmask_ref[...]                            # (H*T, KD + VD)
    opk = opack_ref[...]                             # (VD, VD + D)

    cos = tok[:, :KD]
    sin = tok[:, KD:2 * KD]
    decay = tok[:, 2 * KD:]                          # (T, H*T) scale+batch folded

    # ---- input RMSNorm (ln1 weight folded into the projection) ----
    h1 = x * jax.lax.rsqrt(jnp.mean(x * x, axis=-1, keepdims=True) + RMS_EPS)

    # ---- single fused projection: q | k | rot(q) | rot(k) | v | g ----
    proj = jnp.dot(h1, wproj[:, :4 * KD + 2 * VD],
                   preferred_element_type=jnp.float32)          # (T, 256)
    q = proj[:, :KD] * cos + proj[:, 2 * KD:3 * KD] * sin        # RoPE, all heads
    k = proj[:, KD:2 * KD] * cos + proj[:, 3 * KD:4 * KD] * sin
    v = proj[:, 4 * KD:4 * KD + VD]                              # (T, VD)
    g = proj[:, 4 * KD + VD:]                                    # (T, VD)

    # ---- multi-scale retention: all heads via block-diag masked matmuls ----
    k_bd = jnp.concatenate([k] * H, axis=0) * kvm[:, :KD]        # (H*T, KD)
    v_bd = jnp.concatenate([v] * H, axis=0) * kvm[:, KD:]        # (H*T, VD)
    scores = jax.lax.dot_general(
        q, k_bd, dimension_numbers=(((1,), (1,)), ((), ())),
        preferred_element_type=jnp.float32)                      # (T, H*T)
    o = jnp.dot(scores * decay, v_bd,
                preferred_element_type=jnp.float32)              # (T, VD)

    # ---- per-head RMSNorm (group mean via MXU) + swish output gate ----
    gmean = jnp.dot(o * o, opk[:, :VD],
                    preferred_element_type=jnp.float32)          # (T, VD)
    o = o * jax.lax.rsqrt(gmean + GNORM_EPS)
    o = o * (g * jax.nn.sigmoid(g))
    attn = jnp.dot(o, opk[:, VD:],
                   preferred_element_type=jnp.float32)           # (T, D)

    hmid = x + attn                                              # first residual

    # ---- post-attention RMSNorm (ln2 folded) + SwiGLU MLP ----
    h2 = hmid * jax.lax.rsqrt(jnp.mean(hmid * hmid, axis=-1, keepdims=True)
                              + RMS_EPS)
    gu = jnp.dot(h2, wproj[:, 4 * KD + 2 * VD:],
                 preferred_element_type=jnp.float32)             # (T, 2*I)
    gate = gu[:, :I]
    up = gu[:, I:]
    mlp = jnp.dot(gate * jax.nn.sigmoid(gate) * up, wdown_ref[...],
                  preferred_element_type=jnp.float32)            # (T, D)

    out_ref[...] = hmid + mlp


# ----------------------- constant folding / packing -------------------------
def build_kernel_inputs(params):
    H, dk, dv = NUM_HEADS, HEAD_QK, HEAD_V
    ln1 = np.asarray(params["ln1"], np.float32)
    ln2 = np.asarray(params["ln2"], np.float32)
    gnorm = np.asarray(params["gnorm"], np.float32)
    wq = np.asarray(params["wq_t"], np.float32)
    wk = np.asarray(params["wk_t"], np.float32)
    wv = np.asarray(params["wv_t"], np.float32)
    wg = np.asarray(params["wg_t"], np.float32)
    wo = np.asarray(params["wo_t"], np.float32)
    wgate = np.asarray(params["wgate_t"], np.float32)
    wup = np.asarray(params["wup_t"], np.float32)
    wdown = np.asarray(params["wdown_t"], np.float32)
    cos = np.asarray(params["cos"], np.float32)      # (S, dk)
    sin = np.asarray(params["sin"], np.float32)

    # rotate-half as a signed permutation, folded into the projection weights
    half = dk // 2
    ph = np.zeros((dk, dk), np.float32)
    ph[half:, :half] = -np.eye(half, dtype=np.float32)
    ph[:half, half:] = np.eye(half, dtype=np.float32)
    P = np.kron(np.eye(H, dtype=np.float32), ph)     # (KEY_DIM, KEY_DIM)

    wq_f = ln1[:, None] * wq
    wk_f = ln1[:, None] * wk
    w_proj = np.concatenate(
        [wq_f, wk_f, wq_f @ P, wk_f @ P,
         ln1[:, None] * wv, ln1[:, None] * wg,
         ln2[:, None] * wgate, ln2[:, None] * wup], axis=1)      # (D, 384)

    # token tables: RoPE cos/sin tiled over heads+batch, per-head decay with
    # the dk**-0.5 scale and cross-batch masking folded in.
    cos_t = np.tile(cos, (BATCH, H))                 # (T, KEY_DIM)
    sin_t = np.tile(sin, (BATCH, H))
    pos = np.arange(T) % SEQ
    bat = np.arange(T) // SEQ
    gammas = 1.0 - 2.0 ** (-5.0 - np.arange(H, dtype=np.float64))
    dp = pos[:, None] - pos[None, :]
    ok = (bat[:, None] == bat[None, :]) & (dp >= 0)
    per_head = np.where(ok[None], gammas[:, None, None] ** np.maximum(dp, 0)[None],
                        0.0) * (dk ** -0.5)                      # (H, T, T)
    decay = np.transpose(per_head, (1, 0, 2)).reshape(T, H * T).astype(np.float32)
    tok_tab = np.concatenate([cos_t, sin_t, decay], axis=1)      # (T, 2*KD + H*T)

    # block-diagonal head-selection masks for the batched retention matmuls
    kmask = np.kron(np.eye(H, dtype=np.float32), np.ones((T, dk), np.float32))
    vmask = np.kron(np.eye(H, dtype=np.float32), np.ones((T, dv), np.float32))
    kv_mask = np.concatenate([kmask, vmask], axis=1)             # (H*T, KD+VD)

    # per-head group-mean matrix and output projection (gnorm weight folded)
    gmat = np.kron(np.eye(H, dtype=np.float32),
                   np.full((dv, dv), 1.0 / dv, np.float32))      # (VD, VD)
    wo_f = np.tile(gnorm, H)[:, None] * wo                       # (VD, D)
    o_pack = np.concatenate([gmat, wo_f], axis=1)                # (VD, VD + D)

    return (jnp.asarray(w_proj), jnp.asarray(tok_tab), jnp.asarray(kv_mask),
            jnp.asarray(o_pack), jnp.asarray(wdown))


# ------------------------------ wrapper -------------------------------------
def sigma_decoder_layer(x, params):
    B, S, D = x.shape
    x2d = x.reshape(B * S, D)
    w_proj, tok_tab, kv_mask, o_pack, w_down = build_kernel_inputs(params)

    inputs = (x2d, w_proj, tok_tab, kv_mask, o_pack, w_down)
    in_specs = [pl.BlockSpec(a.shape, lambda i: (0, 0)) for a in inputs]
    out_spec = pl.BlockSpec((B * S, D), lambda i: (0, 0))

    out2d = pl.pallas_call(
        decoder_kernel,
        out_shape=jax.ShapeDtypeStruct((B * S, D), jnp.float32),
        grid_spec=pl.GridSpec(grid=(1,), in_specs=in_specs, out_specs=out_spec),
        compiler_params=pltpu.CompilerParams(
            dimension_semantics=("arbitrary",)),
    )(*inputs)
    return out2d.reshape(B, S, D)


# --------------------------- pure-JAX reference ------------------------------
def ref_forward(x, p):
    H, dk, dv = NUM_HEADS, HEAD_QK, HEAD_V
    B, S, D = x.shape

    def rms(t, w, eps):
        var = jnp.mean(t * t, axis=-1, keepdims=True)
        return t * jax.lax.rsqrt(var + eps) * w

    h1 = rms(x, p["ln1"], RMS_EPS)
    q = (h1 @ p["wq_t"]).reshape(B, S, H, dk)
    k = (h1 @ p["wk_t"]).reshape(B, S, H, dk)
    v = (h1 @ p["wv_t"]).reshape(B, S, H, dv)
    g = (h1 @ p["wg_t"]).reshape(B, S, H, dv)

    cos, sin = p["cos"], p["sin"]

    def rope(t):
        t1, t2 = t[..., : dk // 2], t[..., dk // 2:]
        rot = jnp.concatenate([-t2, t1], axis=-1)
        return t * cos[None, :, None, :] + rot * sin[None, :, None, :]

    q = rope(q) * dk ** -0.5
    k = rope(k)

    gammas = 1.0 - 2.0 ** (-5.0 - jnp.arange(H, dtype=jnp.float32))
    diff = (jnp.arange(S)[:, None] - jnp.arange(S)[None, :]).astype(jnp.float32)
    decay = jnp.where(diff[None] >= 0.0,
                      jnp.exp(diff[None] * jnp.log(gammas)[:, None, None]),
                      0.0)                                        # (H, S, S)

    scores = jnp.einsum("bshd,bthd->bhst", q, k)
    o = jnp.einsum("bhst,bthd->bshd", scores * decay[None], v)    # (B, S, H, dv)
    o = rms(o, p["gnorm"], GNORM_EPS) * (g * jax.nn.sigmoid(g))
    o = o.reshape(B, S, H * dv)
    h = x + o @ p["wo_t"]

    h2 = rms(h, p["ln2"], RMS_EPS)
    mlp = (jax.nn.silu(h2 @ p["wgate_t"]) * (h2 @ p["wup_t"])) @ p["wdown_t"]
    return h + mlp


# ------------------------------ parameters -----------------------------------
def init_params(key):
    ks = jax.random.split(key, 8)
    s = 0.02

    def lin(k, fan_in, fan_out):                 # stored pre-transposed (in, out)
        return jax.random.normal(k, (fan_in, fan_out), jnp.float32) * s

    pos = jnp.arange(SEQ, dtype=jnp.float32)
    inv_freq = 1.0 / (ROPE_BASE ** (jnp.arange(0, HEAD_QK, 2, dtype=jnp.float32)
                                    / HEAD_QK))
    freqs = pos[:, None] * inv_freq[None, :]     # (S, dk/2)
    cos = jnp.concatenate([jnp.cos(freqs), jnp.cos(freqs)], axis=-1)
    sin = jnp.concatenate([jnp.sin(freqs), jnp.sin(freqs)], axis=-1)

    return dict(
        ln1=jnp.ones((HIDDEN,), jnp.float32),
        ln2=jnp.ones((HIDDEN,), jnp.float32),
        gnorm=jnp.ones((HEAD_V,), jnp.float32),
        wq_t=lin(ks[0], HIDDEN, KEY_DIM),
        wk_t=lin(ks[1], HIDDEN, KEY_DIM),
        wv_t=lin(ks[2], HIDDEN, VALUE_DIM),
        wg_t=lin(ks[3], HIDDEN, VALUE_DIM),
        wo_t=lin(ks[4], VALUE_DIM, HIDDEN),
        wgate_t=lin(ks[5], HIDDEN, INTERMEDIATE),
        wup_t=lin(ks[6], HIDDEN, INTERMEDIATE),
        wdown_t=lin(ks[7], INTERMEDIATE, HIDDEN),
        cos=cos,
        sin=sin,
    )


if __name__ == "__main__":
    key = jax.random.PRNGKey(0)
    k_x, k_p = jax.random.split(key)
    x = jax.random.normal(k_x, (BATCH, SEQ, HIDDEN), jnp.float32)
    params = init_params(k_p)

    out = jax.block_until_ready(sigma_decoder_layer(x, params))
    ref = jax.block_until_ready(ref_forward(x, params))
    np.testing.assert_allclose(np.asarray(out), np.asarray(ref),
                               rtol=1e-4, atol=1e-4)
    print("KERNEL_OK")
</pallas_src>

<mosaic_0001>
module attributes {stable_mosaic.version = 11 : i64} {
  func.func @decoder_kernel(%arg0: i32, %arg1: memref<16x32xf32, #tpu.memory_space<vmem>>, %arg2: memref<32x384xf32, #tpu.memory_space<vmem>>, %arg3: memref<16x128xf32, #tpu.memory_space<vmem>>, %arg4: memref<64x96xf32, #tpu.memory_space<vmem>>, %arg5: memref<64x96xf32, #tpu.memory_space<vmem>>, %arg6: memref<64x32xf32, #tpu.memory_space<vmem>>, %arg7: memref<16x32xf32, #tpu.memory_space<vmem>>) attributes {dimension_semantics = [#tpu.dimension_semantics<arbitrary>], iteration_bounds = array<i64: 1>, scalar_prefetch = 0 : i64, scratch_operands = 0 : i64, tpu.core_type = #tpu.core_type<tc>, window_params = [{pipeline_mode = #tpu.pipeline_mode<synchronous>, transform_indices = @transform_0, window_bounds = array<i64: 16, 32>}, {pipeline_mode = #tpu.pipeline_mode<synchronous>, transform_indices = @transform_1, window_bounds = array<i64: 32, 384>}, {pipeline_mode = #tpu.pipeline_mode<synchronous>, transform_indices = @transform_2, window_bounds = array<i64: 16, 128>}, {pipeline_mode = #tpu.pipeline_mode<synchronous>, transform_indices = @transform_3, window_bounds = array<i64: 64, 96>}, {pipeline_mode = #tpu.pipeline_mode<synchronous>, transform_indices = @transform_4, window_bounds = array<i64: 64, 96>}, {pipeline_mode = #tpu.pipeline_mode<synchronous>, transform_indices = @transform_5, window_bounds = array<i64: 64, 32>}, {pipeline_mode = #tpu.pipeline_mode<synchronous>, transform_indices = @transform_6, window_bounds = array<i64: 16, 32>}]} {
    %c0 = arith.constant 0 : index
    %c0_0 = arith.constant 0 : index
    %0 = vector.load %arg1[%c0, %c0_0] : memref<16x32xf32, #tpu.memory_space<vmem>>, vector<16x32xf32>
    %c0_1 = arith.constant 0 : index
    %c0_2 = arith.constant 0 : index
    %1 = vector.load %arg2[%c0_1, %c0_2] : memref<32x384xf32, #tpu.memory_space<vmem>>, vector<32x384xf32>
    %c0_3 = arith.constant 0 : index
    %c0_4 = arith.constant 0 : index
    %2 = vector.load %arg3[%c0_3, %c0_4] : memref<16x128xf32, #tpu.memory_space<vmem>>, vector<16x128xf32>
    %c0_5 = arith.constant 0 : index
    %c0_6 = arith.constant 0 : index
    %3 = vector.load %arg4[%c0_5, %c0_6] : memref<64x96xf32, #tpu.memory_space<vmem>>, vector<64x96xf32>
    %c0_7 = arith.constant 0 : index
    %c0_8 = arith.constant 0 : index
    %4 = vector.load %arg5[%c0_7, %c0_8] : memref<64x96xf32, #tpu.memory_space<vmem>>, vector<64x96xf32>
    %5 = vector.extract_strided_slice %2 {offsets = [0, 0], sizes = [16, 32], strides = [1, 1]} : vector<16x128xf32> to vector<16x32xf32>
    %6 = vector.extract_strided_slice %2 {offsets = [0, 32], sizes = [16, 32], strides = [1, 1]} : vector<16x128xf32> to vector<16x32xf32>
    %7 = vector.extract_strided_slice %2 {offsets = [0, 64], sizes = [16, 64], strides = [1, 1]} : vector<16x128xf32> to vector<16x64xf32>
    %8 = arith.mulf %0, %0 : vector<16x32xf32>
    %cst = arith.constant dense<0.000000e+00> : vector<16xf32>
    %9 = vector.multi_reduction <add>, %8, %cst [1] : vector<16x32xf32> to vector<16xf32>
    %10 = vector.shape_cast %9 : vector<16xf32> to vector<16x1xf32>
    %cst_9 = arith.constant 3.200000e+01 : f32
    %11 = vector.broadcast %cst_9 : f32 to vector<16x1xf32>
    %12 = arith.divf %10, %11 : vector<16x1xf32>
    %cst_10 = arith.constant 9.99999997E-7 : f32
    %13 = vector.broadcast %cst_10 : f32 to vector<16x1xf32>
    %14 = arith.addf %12, %13 : vector<16x1xf32>
    %15 = math.rsqrt %14 : vector<16x1xf32>
    %16 = vector.broadcast %15 : vector<16x1xf32> to vector<16x32xf32>
    %17 = arith.mulf %0, %16 : vector<16x32xf32>
    %18 = vector.extract_strided_slice %1 {offsets = [0, 0], sizes = [32, 256], strides = [1, 1]} : vector<32x384xf32> to vector<32x256xf32>
    %cst_11 = arith.constant dense<0.000000e+00> : vector<16x256xf32>
    %19 = tpu.matmul %17, %18, %cst_11 {dimension_numbers = #tpu.dot_dimension_numbers<[1], [0], [0], [1], [0, 0, 1, 1], [], []>} : vector<16x32xf32>, vector<32x256xf32>, vector<16x256xf32> -> vector<16x256xf32>
    %20 = vector.extract_strided_slice %19 {offsets = [0, 0], sizes = [16, 32], strides = [1, 1]} : vector<16x256xf32> to vector<16x32xf32>
    %21 = arith.mulf %20, %5 : vector<16x32xf32>
    %22 = vector.extract_strided_slice %19 {offsets = [0, 64], sizes = [16, 32], strides = [1, 1]} : vector<16x256xf32> to vector<16x32xf32>
    %23 = arith.mulf %22, %6 : vector<16x32xf32>
    %24 = arith.addf %21, %23 : vector<16x32xf32>
    %25 = vector.extract_strided_slice %19 {offsets = [0, 32], sizes = [16, 32], strides = [1, 1]} : vector<16x256xf32> to vector<16x32xf32>
    %26 = arith.mulf %25, %5 : vector<16x32xf32>
    %27 = vector.extract_strided_slice %19 {offsets = [0, 96], sizes = [16, 32], strides = [1, 1]} : vector<16x256xf32> to vector<16x32xf32>
    %28 = arith.mulf %27, %6 : vector<16x32xf32>
    %29 = arith.addf %26, %28 : vector<16x32xf32>
    %30 = vector.extract_strided_slice %19 {offsets = [0, 128], sizes = [16, 64], strides = [1, 1]} : vector<16x256xf32> to vector<16x64xf32>
    %31 = vector.extract_strided_slice %19 {offsets = [0, 192], sizes = [16, 64], strides = [1, 1]} : vector<16x256xf32> to vector<16x64xf32>
    %32 = tpu.concatenate %29, %29, %29, %29 in 0 : vector<16x32xf32>, vector<16x32xf32>, vector<16x32xf32>, vector<16x32xf32> -> vector<64x32xf32>
    %33 = vector.extract_strided_slice %3 {offsets = [0, 0], sizes = [64, 32], strides = [1, 1]} : vector<64x96xf32> to vector<64x32xf32>
    %34 = arith.mulf %32, %33 : vector<64x32xf32>
    %35 = tpu.concatenate %30, %30, %30, %30 in 0 : vector<16x64xf32>, vector<16x64xf32>, vector<16x64xf32>, vector<16x64xf32> -> vector<64x64xf32>
    %36 = vector.extract_strided_slice %3 {offsets = [0, 32], sizes = [64, 64], strides = [1, 1]} : vector<64x96xf32> to vector<64x64xf32>
    %37 = arith.mulf %35, %36 : vector<64x64xf32>
    %cst_12 = arith.constant dense<0.000000e+00> : vector<16x64xf32>
    %38 = tpu.matmul %24, %34, %cst_12 {dimension_numbers = #tpu.dot_dimension_numbers<[1], [1], [0], [0], [0, 0, 1, 0], [], []>} : vector<16x32xf32>, vector<64x32xf32>, vector<16x64xf32> -> vector<16x64xf32>
    %39 = arith.mulf %38, %7 : vector<16x64xf32>
    %cst_13 = arith.constant dense<0.000000e+00> : vector<16x64xf32>
    %40 = tpu.matmul %39, %37, %cst_13 {dimension_numbers = #tpu.dot_dimension_numbers<[1], [0], [0], [1], [0, 0, 1, 1], [], []>} : vector<16x64xf32>, vector<64x64xf32>, vector<16x64xf32> -> vector<16x64xf32>
    %41 = arith.mulf %40, %40 : vector<16x64xf32>
    %42 = vector.extract_strided_slice %4 {offsets = [0, 0], sizes = [64, 64], strides = [1, 1]} : vector<64x96xf32> to vector<64x64xf32>
    %cst_14 = arith.constant dense<0.000000e+00> : vector<16x64xf32>
    %43 = tpu.matmul %41, %42, %cst_14 {dimension_numbers = #tpu.dot_dimension_numbers<[1], [0], [0], [1], [0, 0, 1, 1], [], []>} : vector<16x64xf32>, vector<64x64xf32>, vector<16x64xf32> -> vector<16x64xf32>
    %cst_15 = arith.constant 9.99999974E-6 : f32
    %44 = vector.broadcast %cst_15 : f32 to vector<16x64xf32>
    %45 = arith.addf %43, %44 : vector<16x64xf32>
    %46 = math.rsqrt %45 : vector<16x64xf32>
    %47 = arith.mulf %40, %46 : vector<16x64xf32>
    %48 = arith.negf %31 : vector<16x64xf32>
    %49 = math.exp %48 : vector<16x64xf32>
    %cst_16 = arith.constant 1.000000e+00 : f32
    %50 = vector.broadcast %cst_16 : f32 to vector<16x64xf32>
    %51 = arith.addf %50, %49 : vector<16x64xf32>
    %52 = arith.divf %50, %51 : vector<16x64xf32>
    %53 = arith.mulf %31, %52 : vector<16x64xf32>
    %54 = arith.mulf %47, %53 : vector<16x64xf32>
    %55 = vector.extract_strided_slice %4 {offsets = [0, 64], sizes = [64, 32], strides = [1, 1]} : vector<64x96xf32> to vector<64x32xf32>
    %cst_17 = arith.constant dense<0.000000e+00> : vector<16x32xf32>
    %56 = tpu.matmul %54, %55, %cst_17 {dimension_numbers = #tpu.dot_dimension_numbers<[1], [0], [0], [1], [0, 0, 1, 1], [], []>} : vector<16x64xf32>, vector<64x32xf32>, vector<16x32xf32> -> vector<16x32xf32>
    %57 = arith.addf %0, %56 : vector<16x32xf32>
    %58 = arith.mulf %57, %57 : vector<16x32xf32>
    %cst_18 = arith.constant dense<0.000000e+00> : vector<16xf32>
    %59 = vector.multi_reduction <add>, %58, %cst_18 [1] : vector<16x32xf32> to vector<16xf32>
    %60 = vector.shape_cast %59 : vector<16xf32> to vector<16x1xf32>
    %cst_19 = arith.constant 3.200000e+01 : f32
    %61 = vector.broadcast %cst_19 : f32 to vector<16x1xf32>
    %62 = arith.divf %60, %61 : vector<16x1xf32>
    %cst_20 = arith.constant 9.99999997E-7 : f32
    %63 = vector.broadcast %cst_20 : f32 to vector<16x1xf32>
    %64 = arith.addf %62, %63 : vector<16x1xf32>
    %65 = math.rsqrt %64 : vector<16x1xf32>
    %66 = vector.broadcast %65 : vector<16x1xf32> to vector<16x32xf32>
    %67 = arith.mulf %57, %66 : vector<16x32xf32>
    %68 = vector.extract_strided_slice %1 {offsets = [0, 256], sizes = [32, 128], strides = [1, 1]} : vector<32x384xf32> to vector<32x128xf32>
    %cst_21 = arith.constant dense<0.000000e+00> : vector<16x128xf32>
    %69 = tpu.matmul %67, %68, %cst_21 {dimension_numbers = #tpu.dot_dimension_numbers<[1], [0], [0], [1], [0, 0, 1, 1], [], []>} : vector<16x32xf32>, vector<32x128xf32>, vector<16x128xf32> -> vector<16x128xf32>
    %70 = vector.extract_strided_slice %69 {offsets = [0, 0], sizes = [16, 64], strides = [1, 1]} : vector<16x128xf32> to vector<16x64xf32>
    %71 = vector.extract_strided_slice %69 {offsets = [0, 64], sizes = [16, 64], strides = [1, 1]} : vector<16x128xf32> to vector<16x64xf32>
    %72 = arith.negf %70 : vector<16x64xf32>
    %73 = math.exp %72 : vector<16x64xf32>
    %cst_22 = arith.constant 1.000000e+00 : f32
    %74 = vector.broadcast %cst_22 : f32 to vector<16x64xf32>
    %75 = arith.addf %74, %73 : vector<16x64xf32>
    %76 = arith.divf %74, %75 : vector<16x64xf32>
    %77 = arith.mulf %70, %76 : vector<16x64xf32>
    %78 = arith.mulf %77, %71 : vector<16x64xf32>
    %c0_23 = arith.constant 0 : index
    %c0_24 = arith.constant 0 : index
    %79 = vector.load %arg6[%c0_23, %c0_24] : memref<64x32xf32, #tpu.memory_space<vmem>>, vector<64x32xf32>
    %cst_25 = arith.constant dense<0.000000e+00> : vector<16x32xf32>
    %80 = tpu.matmul %78, %79, %cst_25 {dimension_numbers = #tpu.dot_dimension_numbers<[1], [0], [0], [1], [0, 0, 1, 1], [], []>} : vector<16x64xf32>, vector<64x32xf32>, vector<16x32xf32> -> vector<16x32xf32>
    %81 = arith.addf %57, %80 : vector<16x32xf32>
    %c0_26 = arith.constant 0 : index
    %c0_27 = arith.constant 0 : index
    %82 = vector.load %arg7[%c0_26, %c0_27] : memref<16x32xf32, #tpu.memory_space<vmem>>, vector<16x32xf32>
    tpu.vector_store %arg7[%c0_26, %c0_27], %81 {strides = array<i32>} : memref<16x32xf32, #tpu.memory_space<vmem>>, vector<16x32xf32>,
    return
  }
  func.func @transform_0(%arg0: i32) -> (i32, i32) {
    %c0_i32 = arith.constant 0 : i32
    %c0_i32_0 = arith.constant 0 : i32
    %c0_i32_1 = arith.constant 0 : i32
    return %c0_i32, %c0_i32_0 : i32, i32
  }
  func.func @transform_1(%arg0: i32) -> (i32, i32) {
    %c0_i32 = arith.constant 0 : i32
    %c0_i32_0 = arith.constant 0 : i32
    %c0_i32_1 = arith.constant 0 : i32
    return %c0_i32, %c0_i32_0 : i32, i32
  }
  func.func @transform_2(%arg0: i32) -> (i32, i32) {
    %c0_i32 = arith.constant 0 : i32
    %c0_i32_0 = arith.constant 0 : i32
    %c0_i32_1 = arith.constant 0 : i32
    return %c0_i32, %c0_i32_0 : i32, i32
  }
  func.func @transform_3(%arg0: i32) -> (i32, i32) {
    %c0_i32 = arith.constant 0 : i32
    %c0_i32_0 = arith.constant 0 : i32
    %c0_i32_1 = arith.constant 0 : i32
    return %c0_i32, %c0_i32_0 : i32, i32
  }
  func.func @transform_4(%arg0: i32) -> (i32, i32) {
    %c0_i32 = arith.constant 0 : i32
    %c0_i32_0 = arith.constant 0 : i32
    %c0_i32_1 = arith.constant 0 : i32
    return %c0_i32, %c0_i32_0 : i32, i32
  }
  func.func @transform_5(%arg0: i32) -> (i32, i32) {
    %c0_i32 = arith.constant 0 : i32
    %c0_i32_0 = arith.constant 0 : i32
    %c0_i32_1 = arith.constant 0 : i32
    return %c0_i32, %c0_i32_0 : i32, i32
  }
  func.func @transform_6(%arg0: i32) -> (i32, i32) {
    %c0_i32 = arith.constant 0 : i32
    %c0_i32_0 = arith.constant 0 : i32
    %c0_i32_1 = arith.constant 0 : i32
    return %c0_i32, %c0_i32_0 : i32, i32
  }
}

</mosaic_0001>

<llo_original>
// kernel: tpu_custom_call.1
$region0: #{tpu_custom_call.1}
  #allocation0 [shape = 'u32[]', space=smem, size = 0x4, offset = 0x4, fixed_abs, tag = 'smem constant byte address 0x4 - core index']
  #allocation1 [shape = 'u32[72,128]{1,0:T(1,128)}', space=vmem, size = 0x9000, scoped, tag = 'internal scratch']
  %s0 = inlined_call_operand.hbm [shape: f32[16,32], index: 0, kind: input, shape index: {}]
  %s1 = inlined_call_operand.vmem [shape: f32[32,384], index: 1, kind: input, shape index: {}]
  %s2 = inlined_call_operand.hbm [shape: f32[16,128], index: 2, kind: input, shape index: {}]
  %s3 = inlined_call_operand.hbm [shape: f32[64,96], index: 3, kind: input, shape index: {}]
  %s4 = inlined_call_operand.hbm [shape: f32[64,96], index: 4, kind: input, shape index: {}]
  %s5 = inlined_call_operand.vmem [shape: f32[64,32], index: 5, kind: input, shape index: {}]
  %s6 = inlined_call_operand.hbm [shape: f32[16,32], index: 6, kind: output, shape index: {}]
  %s7 = sld [smem:[#allocation0]]
  $region50: #{tpu_custom_call.1} parent=0
    _
  %s9 = ssub.s32 1, %s7
  %s10 = scalar_select 0, %s9, %s7
  $region1: #{tpu_custom_call.1} parent=0
    #allocation2 [shape = 'u8[8192]{0}', space=vmem, size = 0x2000, scoped, tag = 'input window, operand 0, single buffered']
    #allocation3 [shape = 's32[1]{0}', space=sflag, size = 0x4, scoped, tag = 'scoped memory for tpu_custom_call.1']
    #allocation4 [shape = 's32[1]{0}', space=sflag, size = 0x4, scoped, tag = 'scoped memory for tpu_custom_call.1']
    #allocation5 [shape = 'u8[8192]{0}', space=vmem, size = 0x2000, scoped, tag = 'input window, operand 2, single buffered']
    #allocation6 [shape = 's32[1]{0}', space=sflag, size = 0x4, scoped, tag = 'scoped memory for tpu_custom_call.1']
    #allocation7 [shape = 'u8[32768]{0}', space=vmem, size = 0x8000, scoped, tag = 'input window, operand 3, single buffered']
    #allocation8 [shape = 'u8[32768]{0}', space=vmem, size = 0x8000, scoped, tag = 'input window, operand 4, single buffered']
    #allocation9 [shape = 's32[1]{0}', space=sflag, size = 0x4, scoped, tag = 'scoped memory for tpu_custom_call.1']
    #allocation10 [shape = 'u8[8192]{0}', space=vmem, size = 0x2000, scoped, tag = 'output window, operand 0, single buffered']
    %11 = vsyncpa [#allocation3], 0
    %12 = vsyncpa [#allocation6], 0
    %13 = vsyncpa [#allocation9], 0
    %14 = vsyncpa [#allocation4], 0
    // Predicated region
    $region2: #{tpu_custom_call.1} parent=1 // pred_check
      _
    $region3: #{tpu_custom_call.1} parent=1 // pred_check_branch
      %16 = sbr.rel (0) target = $region5
    $region4: #{tpu_custom_call.1} parent=1 // pred_region
      %18 = vsyncadd [#allocation3], 0
      %s19 = sshll.u32 %s0, 4
      %s20 = int_to_ptr.hbm [resolvable:$true] %s19
      %s21 = sshll.u32 [#allocation2], 4
      %s22 = int_to_ptr.vmem [resolvable:$true] %s21
      %27 = dma.hbm_to_vmem [thread:$0]  %s20, 256, %s22, [#allocation3], 128, 128, 8
    $region5: #{tpu_custom_call.1} parent=1 // pred_fallthru
      _
    // Predicated region
    $region6: #{tpu_custom_call.1} parent=1 // pred_check
      _
    $region7: #{tpu_custom_call.1} parent=1 // pred_check_branch
      %29 = sbr.rel (0) target = $region9
    $region8: #{tpu_custom_call.1} parent=1 // pred_region
      _
    $region9: #{tpu_custom_call.1} parent=1 // pred_fallthru
      _
    // Predicated region
    $region10: #{tpu_custom_call.1} parent=1 // pred_check
      _
    $region11: #{tpu_custom_call.1} parent=1 // pred_check_branch
      %31 = sbr.rel (0) target = $region13
    $region12: #{tpu_custom_call.1} parent=1 // pred_region
      %33 = vsyncadd [#allocation6], 0
      %s34 = sshll.u32 %s2, 4
      %s35 = int_to_ptr.hbm [resolvable:$true] %s34
      %s36 = sshll.u32 [#allocation5], 4
      %s37 = int_to_ptr.vmem [resolvable:$true] %s36
      %42 = dma.hbm_to_vmem [thread:$0]  %s35, 256, %s37, [#allocation6], 128, 128, 8
    $region13: #{tpu_custom_call.1} parent=1 // pred_fallthru
      _
    // Predicated region
    $region14: #{tpu_custom_call.1} parent=1 // pred_check
      _
    $region15: #{tpu_custom_call.1} parent=1 // pred_check_branch
      %44 = sbr.rel (0) target = $region17
    $region16: #{tpu_custom_call.1} parent=1 // pred_region
      %46 = vsyncadd [#allocation6], 0
      %s47 = sshll.u32 %s3, 4
      %s48 = int_to_ptr.hbm [resolvable:$true] %s47
      %s49 = sshll.u32 [#allocation7], 4
      %s50 = int_to_ptr.vmem [resolvable:$true] %s49
      %55 = dma.hbm_to_vmem [thread:$0]  %s48, 1024, %s50, [#allocation6], 128, 128, 8
    $region17: #{tpu_custom_call.1} parent=1 // pred_fallthru
      _
    // Predicated region
    $region18: #{tpu_custom_call.1} parent=1 // pred_check
      _
    $region19: #{tpu_custom_call.1} parent=1 // pred_check_branch
      %57 = sbr.rel (0) target = $region21
    $region20: #{tpu_custom_call.1} parent=1 // pred_region
      %59 = vsyncadd [#allocation9], 0
      %s60 = sshll.u32 %s4, 4
      %s61 = int_to_ptr.hbm [resolvable:$true] %s60
      %s62 = sshll.u32 [#allocation8], 4
      %s63 = int_to_ptr.vmem [resolvable:$true] %s62
      %68 = dma.hbm_to_vmem [thread:$0]  %s61, 1024, %s63, [#allocation9], 128, 128, 8
    $region21: #{tpu_custom_call.1} parent=1 // pred_fallthru
      _
    // Predicated region
    $region22: #{tpu_custom_call.1} parent=1 // pred_check
      _
    $region23: #{tpu_custom_call.1} parent=1 // pred_check_branch
      %70 = sbr.rel (0) target = $region25
    $region24: #{tpu_custom_call.1} parent=1 // pred_region
      _
    $region25: #{tpu_custom_call.1} parent=1 // pred_fallthru
      _
    // Predicated region
    $region26: #{tpu_custom_call.1} parent=1 // pred_check
      _
    $region27: #{tpu_custom_call.1} parent=1 // pred_check_branch
      %72 = sbr.rel (0) target = $region29
    $region28: #{tpu_custom_call.1} parent=1 // pred_region
      %74 = dma.done [#allocation3], 256
    $region29: #{tpu_custom_call.1} parent=1 // pred_fallthru
      _
    // Predicated region
    $region30: #{tpu_custom_call.1} parent=1 // pred_check
      _
    $region31: #{tpu_custom_call.1} parent=1 // pred_check_branch
      %76 = sbr.rel (0) target = $region33
    $region32: #{tpu_custom_call.1} parent=1 // pred_region
      %78 = dma.done [#allocation6], 256
    $region33: #{tpu_custom_call.1} parent=1 // pred_fallthru
      _
    // Predicated region
    $region34: #{tpu_custom_call.1} parent=1 // pred_check
      _
    $region35: #{tpu_custom_call.1} parent=1 // pred_check_branch
      %80 = sbr.rel (0) target = $region37
    $region36: #{tpu_custom_call.1} parent=1 // pred_region
      %82 = dma.done [#allocation6], 1024
    $region37: #{tpu_custom_call.1} parent=1 // pred_fallthru
      _
    // Predicated region
    $region38: #{tpu_custom_call.1} parent=1 // pred_check
      _
    $region39: #{tpu_custom_call.1} parent=1 // pred_check_branch
      %84 = sbr.rel (0) target = $region41
    $region40: #{tpu_custom_call.1} parent=1 // pred_region
      %86 = dma.done [#allocation9], 1024
    $region41: #{tpu_custom_call.1} parent=1 // pred_fallthru
      _
    %v87 = vld [vmem:[#allocation2] sm:$0xff]
    %v88 = vld [vmem:[#allocation2 + $0x8] sm:$0xff]
    %v89 = vld [vmem:[%s1] sm:$0xff]
    %v90 = vld [vmem:[%s1 + $0x8] sm:$0xff]
    %v91 = vld [vmem:[%s1 + $0x10] sm:$0xff]
    %v92 = vld [vmem:[%s1 + $0x18] sm:$0xff]
    %v93 = vld [vmem:[%s1 + $0x20] sm:$0xff]
    %v94 = vld [vmem:[%s1 + $0x28] sm:$0xff]
    %v95 = vld [vmem:[%s1 + $0x30] sm:$0xff]
    %v96 = vld [vmem:[%s1 + $0x38] sm:$0xff]
    %v97 = vld [vmem:[%s1 + $0x40] sm:$0xff]
    %v98 = vld [vmem:[%s1 + $0x48] sm:$0xff]
    %v99 = vld [vmem:[%s1 + $0x50] sm:$0xff]
    %v100 = vld [vmem:[%s1 + $0x58] sm:$0xff]
    %v101 = vld [vmem:[#allocation5] sm:$0xff]
    %v102 = vld [vmem:[#allocation5 + $0x8] sm:$0xff]
    %v103 = vld [vmem:[#allocation7] sm:$0xff]
    %v104 = vld [vmem:[#allocation7 + $0x8] sm:$0xff]
    %v105 = vld [vmem:[#allocation7 + $0x10] sm:$0xff]
    %v106 = vld [vmem:[#allocation7 + $0x18] sm:$0xff]
    %v107 = vld [vmem:[#allocation7 + $0x20] sm:$0xff]
    %v108 = vld [vmem:[#allocation7 + $0x28] sm:$0xff]
    %v109 = vld [vmem:[#allocation7 + $0x30] sm:$0xff]
    %v110 = vld [vmem:[#allocation7 + $0x38] sm:$0xff]
    %v111 = vld [vmem:[#allocation8] sm:$0xff]
    %v112 = vld [vmem:[#allocation8 + $0x8] sm:$0xff]
    %v113 = vld [vmem:[#allocation8 + $0x10] sm:$0xff]
    %v114 = vld [vmem:[#allocation8 + $0x18] sm:$0xff]
    %v115 = vld [vmem:[#allocation8 + $0x20] sm:$0xff]
    %v116 = vld [vmem:[#allocation8 + $0x28] sm:$0xff]
    %v117 = vld [vmem:[#allocation8 + $0x30] sm:$0xff]
    %v118 = vld [vmem:[#allocation8 + $0x38] sm:$0xff]
    %v119 = vmul.f32 %v87, %v87
    %v120 = vmul.f32 %v88, %v88
    %vm121 = vcmask 261120
    %v122 = vsel %vm121, %v119, 0.0
    %123 = vadd.xlane.f32.xlu0 %v122
    %v124 = vpop.xlane.xlu0 %123
    %v125 = vsel %vm121, %v120, 0.0
    %126 = vadd.xlane.f32.xlu0 %v125
    %v127 = vpop.xlane.xlu0 %126
    %v128 = vrcp.pop 32.0
    %v129 = vmul.f32 32.0, %v128
    %v130 = vsub.f32 1.0, %v129
    %v131 = vmul.f32 %v128, %v130
    %v132 = vadd.f32 %v128, %v131
    %vm133 = vweird.f32 %v128
    %v134 = vsel %vm133, %v128, %v132
    %v135 = vmul.f32 %v124, %v134
    %v136 = vmul.f32 %v127, %v134
    %v137 = vadd.f32 %v135, 1e-06
    %v138 = vadd.f32 %v136, 1e-06
    %v139 = vrsqrt.pop %v137
    %v140 = vmul.f32 %v139, %v137
    %v141 = vmul.f32 %v140, %v139
    %v142 = vmul.f32 0.5, %v141
    %v143 = vsub.f32 1.5, %v142
    %v144 = vmul.f32 %v139, %v143
    %vm145 = vweird.f32 %v137
    %vm146 = vweird.f32 %v139
    %vm147 = vmor %vm145, %vm146
    %v148 = vsel %vm147, %v139, %v144
    %v149 = vrsqrt.pop %v138
    %v150 = vmul.f32 %v149, %v138
    %v151 = vmul.f32 %v150, %v149
    %v152 = vmul.f32 0.5, %v151
    %v153 = vsub.f32 1.5, %v152
    %v154 = vmul.f32 %v149, %v153
    %vm155 = vweird.f32 %v138
    %vm156 = vweird.f32 %v149
    %vm157 = vmor %vm155, %vm156
    %v158 = vsel %vm157, %v149, %v154
    %v159 = vmul.f32 %v87, %v148
    %v160 = vmul.f32 %v88, %v158
    %v162 = vsel %vm121, %v159, 0
    %v165 = vsel %vm121, %v160, 0
    %167 = vmatpush.msra.mxu0 0.0
    %168 = vmatpush.msra.mxu0 0.0
    %169 = vmatpush.msra.mxu0 0.0
    %170 = vmatpush.msra.mxu0 0.0
    %171 = vmatpush.msra.mxu0 0.0
    %172 = vmatpush.msra.mxu0 0.0
    %173 = vmatpush.msra.mxu0 0.0
    %174 = vmatpush.msra.mxu0 0.0
    %175 = vmatpush.msra.mxu0 0.0
    %176 = vmatpush.msra.mxu0 0.0
    %177 = vmatpush.msra.mxu0 0.0
    %178 = vmatpush.msra.mxu0 0.0
    %179 = vmatpush.msra.mxu0 %v98
    %180 = vmatpush.msra.mxu0 %v95
    %181 = vmatpush.msra.mxu0 %v92
    %182 = vmatpush.msra.mxu0 %v89
    %183 = vmatmul.f32.gmra.mxu0 %v162
    %v184 = vpop.f32.mrf.mxu0
    %v185 = vadd.f32 0.0, %v184
    %186 = vmatmul.f32.gmra.mxu0 %v165
    %v187 = vpop.f32.mrf.mxu0
    %v188 = vadd.f32 0.0, %v187
    %189 = vdwg.mxu0
    %190 = vmatpush.msra.mxu0 0.0
    %191 = vmatpush.msra.mxu0 0.0
    %192 = vmatpush.msra.mxu0 0.0
    %193 = vmatpush.msra.mxu0 0.0
    %194 = vmatpush.msra.mxu0 0.0
    %195 = vmatpush.msra.mxu0 0.0
    %196 = vmatpush.msra.mxu0 0.0
    %197 = vmatpush.msra.mxu0 0.0
    %198 = vmatpush.msra.mxu0 0.0
    %199 = vmatpush.msra.mxu0 0.0
    %200 = vmatpush.msra.mxu0 0.0
    %201 = vmatpush.msra.mxu0 0.0
    %202 = vmatpush.msra.mxu0 %v99
    %203 = vmatpush.msra.mxu0 %v96
    %204 = vmatpush.msra.mxu0 %v93
    %205 = vmatpush.msra.mxu0 %v90
    %206 = vmatmul.f32.gmra.mxu0 %v162
    %v207 = vpop.f32.mrf.mxu0
    %v208 = vadd.f32 0.0, %v207
    %209 = vmatmul.f32.gmra.mxu0 %v165
    %v210 = vpop.f32.mrf.mxu0
    %v211 = vadd.f32 0.0, %v210
    %212 = vdwg.mxu0
    %v213 = vmul.f32 %v185, %v101
    %v214 = vmul.f32 %v188, %v102
    %217 = vrot.lane.b32.xlu0 %v101, 32
    %v218 = vpop.permute.xlu0 %217
    %219 = vrot.lane.b32.xlu0 %v102, 32
    %v220 = vpop.permute.xlu0 %219
    %v223 = vmul.f32 %v185, %v218
    %v224 = vmul.f32 %v188, %v220
    %227 = vrot.lane.b32.xlu0 %v223, 64
    %v228 = vpop.permute.xlu0 %227
    %229 = vrot.lane.b32.xlu0 %v224, 64
    %v230 = vpop.permute.xlu0 %229
    %v233 = vadd.f32 %v213, %v228
    %v234 = vadd.f32 %v214, %v230
    %235 = vrot.lane.b32.xlu0 %v101, 64
    %v236 = vpop.permute.xlu0 %235
    %237 = vrot.lane.b32.xlu0 %v102, 64
    %v238 = vpop.permute.xlu0 %237
    %v241 = vmul.f32 %v185, %v236
    %v242 = vmul.f32 %v188, %v238
    %245 = vrot.lane.b32.xlu0 %v241, 64
    %v246 = vpop.permute.xlu0 %245
    %247 = vrot.lane.b32.xlu0 %v242, 64
    %v248 = vpop.permute.xlu0 %247
    %v251 = vadd.f32 %v223, %v246
    %v252 = vadd.f32 %v224, %v248
    %261 = vrot.lane.b32.xlu0 %v103, 32
    %v262 = vpop.permute.xlu0 %261
    %263 = vrot.lane.b32.xlu0 %v104, 32
    %v264 = vpop.permute.xlu0 %263
    %265 = vrot.lane.b32.xlu0 %v105, 32
    %v266 = vpop.permute.xlu0 %265
    %267 = vrot.lane.b32.xlu0 %v106, 32
    %v268 = vpop.permute.xlu0 %267
    %269 = vrot.lane.b32.xlu0 %v107, 32
    %v270 = vpop.permute.xlu0 %269
    %271 = vrot.lane.b32.xlu0 %v108, 32
    %v272 = vpop.permute.xlu0 %271
    %273 = vrot.lane.b32.xlu0 %v109, 32
    %v274 = vpop.permute.xlu0 %273
    %275 = vrot.lane.b32.xlu0 %v110, 32
    %v276 = vpop.permute.xlu0 %275
    %v285 = vmul.f32 %v251, %v262
    %v286 = vmul.f32 %v252, %v264
    %v287 = vmul.f32 %v251, %v266
    %v288 = vmul.f32 %v252, %v268
    %v289 = vmul.f32 %v251, %v270
    %v290 = vmul.f32 %v252, %v272
    %v291 = vmul.f32 %v251, %v274
    %v292 = vmul.f32 %v252, %v276
    %293 = vrot.lane.b32.xlu0 %v103, 96
    %v294 = vpop.permute.xlu0 %293
    %295 = vrot.lane.b32.xlu0 %v104, 96
    %v296 = vpop.permute.xlu0 %295
    %297 = vrot.lane.b32.xlu0 %v105, 96
    %v298 = vpop.permute.xlu0 %297
    %299 = vrot.lane.b32.xlu0 %v106, 96
    %v300 = vpop.permute.xlu0 %299
    %301 = vrot.lane.b32.xlu0 %v107, 96
    %v302 = vpop.permute.xlu0 %301
    %303 = vrot.lane.b32.xlu0 %v108, 96
    %v304 = vpop.permute.xlu0 %303
    %305 = vrot.lane.b32.xlu0 %v109, 96
    %v306 = vpop.permute.xlu0 %305
    %307 = vrot.lane.b32.xlu0 %v110, 96
    %v308 = vpop.permute.xlu0 %307
    %v317 = vmul.f32 %v208, %v294
    %v318 = vmul.f32 %v211, %v296
    %v319 = vmul.f32 %v208, %v298
    %v320 = vmul.f32 %v211, %v300
    %v321 = vmul.f32 %v208, %v302
    %v322 = vmul.f32 %v211, %v304
    %v323 = vmul.f32 %v208, %v306
    %v324 = vmul.f32 %v211, %v308
    %333 = vrot.lane.b32.xlu0 %v285, 96
    %v334 = vpop.permute.xlu0 %333
    %335 = vrot.lane.b32.xlu0 %v286, 96
    %v336 = vpop.permute.xlu0 %335
    %337 = vrot.lane.b32.xlu0 %v287, 96
    %v338 = vpop.permute.xlu0 %337
    %339 = vrot.lane.b32.xlu0 %v288, 96
    %v340 = vpop.permute.xlu0 %339
    %341 = vrot.lane.b32.xlu0 %v289, 96
    %v342 = vpop.permute.xlu0 %341
    %343 = vrot.lane.b32.xlu0 %v290, 96
    %v344 = vpop.permute.xlu0 %343
    %345 = vrot.lane.b32.xlu0 %v291, 96
    %v346 = vpop.permute.xlu0 %345
    %347 = vrot.lane.b32.xlu0 %v292, 96
    %v348 = vpop.permute.xlu0 %347
    %v350 = vsel %vm121, %v233, 0
    %v353 = vsel %vm121, %v234, 0
    %v355 = vsel %vm121, %v334, 0
    %v357 = vsel %vm121, %v336, 0
    %v359 = vsel %vm121, %v338, 0
    %v361 = vsel %vm121, %v340, 0
    %v363 = vsel %vm121, %v342, 0
    %v365 = vsel %vm121, %v344, 0
    %v367 = vsel %vm121, %v346, 0
    %v369 = vsel %vm121, %v348, 0
    %371 = vmatpush.xpose.msra.mxu0 0.0
    %372 = vmatpush.xpose.msra.mxu0 0.0
    %373 = vmatpush.xpose.msra.mxu0 0.0
    %374 = vmatpush.xpose.msra.mxu0 0.0
    %375 = vmatpush.xpose.msra.mxu0 0.0
    %376 = vmatpush.xpose.msra.mxu0 0.0
    %377 = vmatpush.xpose.msra.mxu0 0.0
    %378 = vmatpush.xpose.msra.mxu0 0.0
    %379 = vmatpush.xpose.msra.mxu0 %v369
    %380 = vmatpush.xpose.msra.mxu0 %v367
    %381 = vmatpush.xpose.msra.mxu0 %v365
    %382 = vmatpush.xpose.msra.mxu0 %v363
    %383 = vmatpush.xpose.msra.mxu0 %v361
    %384 = vmatpush.xpose.msra.mxu0 %v359
    %385 = vmatpush.xpose.msra.mxu0 %v357
    %386 = vmatpush.xpose.msra.mxu0 %v355
    %387 = vmatmul.f32.gmra.mxu0 %v350
    %v388 = vpop.f32.mrf.mxu0
    %v389 = vadd.f32 0.0, %v388
    %390 = vmatmul.f32.gmra.mxu0 %v353
    %v391 = vpop.f32.mrf.mxu0
    %v392 = vadd.f32 0.0, %v391
    %393 = vdwg.mxu0
    %v394 = vmul.f32 %v389, %v236
    %v395 = vmul.f32 %v392, %v238
    %vm396 = vcmask 523264
    %v398 = vsel %vm396, %v394, 0
    %v401 = vsel %vm396, %v395, 0
    %403 = vmatpush.msra.mxu0 0.0
    %404 = vmatpush.msra.mxu0 0.0
    %405 = vmatpush.msra.mxu0 0.0
    %406 = vmatpush.msra.mxu0 0.0
    %407 = vmatpush.msra.mxu0 0.0
    %408 = vmatpush.msra.mxu0 0.0
    %409 = vmatpush.msra.mxu0 0.0
    %410 = vmatpush.msra.mxu0 0.0
    %411 = vmatpush.msra.mxu0 %v324
    %412 = vmatpush.msra.mxu0 %v323
    %413 = vmatpush.msra.mxu0 %v322
    %414 = vmatpush.msra.mxu0 %v321
    %415 = vmatpush.msra.mxu0 %v320
    %416 = vmatpush.msra.mxu0 %v319
    %417 = vmatpush.msra.mxu0 %v318
    %418 = vmatpush.msra.mxu0 %v317
    %419 = vmatmul.f32.gmra.mxu0 %v398
    %v420 = vpop.f32.mrf.mxu0
    %v421 = vadd.f32 0.0, %v420
    %422 = vmatmul.f32.gmra.mxu0 %v401
    %v423 = vpop.f32.mrf.mxu0
    %v424 = vadd.f32 0.0, %v423
    %425 = vdwg.mxu0
    %v426 = vmul.f32 %v421, %v421
    %v427 = vmul.f32 %v424, %v424
    %v429 = vsel %vm396, %v426, 0
    %v432 = vsel %vm396, %v427, 0
    %434 = vmatpush.msra.mxu0 0.0
    %435 = vmatpush.msra.mxu0 0.0
    %436 = vmatpush.msra.mxu0 0.0
    %437 = vmatpush.msra.mxu0 0.0
    %438 = vmatpush.msra.mxu0 0.0
    %439 = vmatpush.msra.mxu0 0.0
    %440 = vmatpush.msra.mxu0 0.0
    %441 = vmatpush.msra.mxu0 0.0
    %442 = vmatpush.msra.mxu0 %v118
    %443 = vmatpush.msra.mxu0 %v117
    %444 = vmatpush.msra.mxu0 %v116
    %445 = vmatpush.msra.mxu0 %v115
    %446 = vmatpush.msra.mxu0 %v114
    %447 = vmatpush.msra.mxu0 %v113
    %448 = vmatpush.msra.mxu0 %v112
    %449 = vmatpush.msra.mxu0 %v111
    %450 = vmatmul.f32.gmra.mxu0 %v429
    %v451 = vpop.f32.mrf.mxu0
    %v452 = vadd.f32 1e-05, %v451
    %453 = vmatmul.f32.gmra.mxu0 %v432
    %v454 = vpop.f32.mrf.mxu0
    %v455 = vadd.f32 1e-05, %v454
    %456 = vdwg.mxu0
    %v457 = vrsqrt.pop %v452
    %v458 = vmul.f32 %v457, %v452
    %v459 = vmul.f32 %v458, %v457
    %v460 = vmul.f32 0.5, %v459
    %v461 = vsub.f32 1.5, %v460
    %v462 = vmul.f32 %v457, %v461
    %vm463 = vweird.f32 %v452
    %vm464 = vweird.f32 %v457
    %vm465 = vmor %vm463, %vm464
    %v466 = vsel %vm465, %v457, %v462
    %v467 = vrsqrt.pop %v455
    %v468 = vmul.f32 %v467, %v455
    %v469 = vmul.f32 %v468, %v467
    %v470 = vmul.f32 0.5, %v469
    %v471 = vsub.f32 1.5, %v470
    %v472 = vmul.f32 %v467, %v471
    %vm473 = vweird.f32 %v455
    %vm474 = vweird.f32 %v467
    %vm475 = vmor %vm473, %vm474
    %v476 = vsel %vm475, %v467, %v472
    %v477 = vmul.f32 %v421, %v466
    %v478 = vmul.f32 %v424, %v476
    %v479 = vxor.u32 %v208, 2147483648
    %v480 = vxor.u32 %v211, 2147483648
    %v481 = vmul.f32 %v479, 1.442695
    %v482 = vpow.pop %v481
    %v483 = vmul.f32 %v480, 1.442695
    %v484 = vpow.pop %v483
    %v485 = vadd.f32 %v482, 1.0
    %v486 = vadd.f32 %v484, 1.0
    %v487 = vrcp.pop %v485
    %v488 = vmul.f32 %v485, %v487
    %v489 = vsub.f32 1.0, %v488
    %v490 = vmul.f32 %v487, %v489
    %v491 = vadd.f32 %v487, %v490
    %vm492 = vweird.f32 %v485
    %vm493 = vweird.f32 %v487
    %vm494 = vmor %vm492, %vm493
    %v495 = vsel %vm494, %v487, %v491
    %v496 = vand.u32 2147483647, %v485
    %vm497 = vcmp.eq.f32.partialorder %v496, 8.507059e+37
    %v498 = vand.u32 %v485, 2147483648
    %v499 = vor.u32 1.1754944e-38, %v498
    %v500 = vsel %vm497, %v499, %v495
    %v501 = vmul.f32 1.0, %v500
    %v502 = vrcp.pop %v486
    %v503 = vmul.f32 %v486, %v502
    %v504 = vsub.f32 1.0, %v503
    %v505 = vmul.f32 %v502, %v504
    %v506 = vadd.f32 %v502, %v505
    %vm507 = vweird.f32 %v486
    %vm508 = vweird.f32 %v502
    %vm509 = vmor %vm507, %vm508
    %v510 = vsel %vm509, %v502, %v506
    %v511 = vand.u32 2147483647, %v486
    %vm512 = vcmp.eq.f32.partialorder %v511, 8.507059e+37
    %v513 = vand.u32 %v486, 2147483648
    %v514 = vor.u32 1.1754944e-38, %v513
    %v515 = vsel %vm512, %v514, %v510
    %v516 = vmul.f32 1.0, %v515
    %v517 = vmul.f32 %v208, %v501
    %v518 = vmul.f32 %v211, %v516
    %521 = vrot.lane.b32.xlu0 %v517, 64
    %v522 = vpop.permute.xlu0 %521
    %523 = vrot.lane.b32.xlu0 %v518, 64
    %v524 = vpop.permute.xlu0 %523
    %v527 = vmul.f32 %v477, %v522
    %v528 = vmul.f32 %v478, %v524
    %537 = vrot.lane.b32.xlu0 %v111, 64
    %v538 = vpop.permute.xlu0 %537
    %539 = vrot.lane.b32.xlu0 %v112, 64
    %v540 = vpop.permute.xlu0 %539
    %541 = vrot.lane.b32.xlu0 %v113, 64
    %v542 = vpop.permute.xlu0 %541
    %543 = vrot.lane.b32.xlu0 %v114, 64
    %v544 = vpop.permute.xlu0 %543
    %545 = vrot.lane.b32.xlu0 %v115, 64
    %v546 = vpop.permute.xlu0 %545
    %547 = vrot.lane.b32.xlu0 %v116, 64
    %v548 = vpop.permute.xlu0 %547
    %549 = vrot.lane.b32.xlu0 %v117, 64
    %v550 = vpop.permute.xlu0 %549
    %551 = vrot.lane.b32.xlu0 %v118, 64
    %v552 = vpop.permute.xlu0 %551
    %v562 = vsel %vm396, %v527, 0
    %v565 = vsel %vm396, %v528, 0
    %567 = vmatpush.msra.mxu0 0.0
    %568 = vmatpush.msra.mxu0 0.0
    %569 = vmatpush.msra.mxu0 0.0
    %570 = vmatpush.msra.mxu0 0.0
    %571 = vmatpush.msra.mxu0 0.0
    %572 = vmatpush.msra.mxu0 0.0
    %573 = vmatpush.msra.mxu0 0.0
    %574 = vmatpush.msra.mxu0 0.0
    %575 = vmatpush.msra.mxu0 %v552
    %576 = vmatpush.msra.mxu0 %v550
    %577 = vmatpush.msra.mxu0 %v548
    %578 = vmatpush.msra.mxu0 %v546
    %579 = vmatpush.msra.mxu0 %v544
    %580 = vmatpush.msra.mxu0 %v542
    %581 = vmatpush.msra.mxu0 %v540
    %582 = vmatpush.msra.mxu0 %v538
    %583 = vmatmul.f32.gmra.mxu0 %v562
    %v584 = vpop.f32.mrf.mxu0
    %v585 = vadd.f32 0.0, %v584
    %586 = vmatmul.f32.gmra.mxu0 %v565
    %v587 = vpop.f32.mrf.mxu0
    %v588 = vadd.f32 0.0, %v587
    %589 = vdwg.mxu0
    %v590 = vadd.f32 %v87, %v585
    %v591 = vadd.f32 %v88, %v588
    %v592 = vmul.f32 %v590, %v590
    %v593 = vmul.f32 %v591, %v591
    %v594 = vsel %vm121, %v592, 0.0
    %595 = vadd.xlane.f32.xlu0 %v594
    %v596 = vpop.xlane.xlu0 %595
    %v597 = vsel %vm121, %v593, 0.0
    %598 = vadd.xlane.f32.xlu0 %v597
    %v599 = vpop.xlane.xlu0 %598
    %v600 = vmul.f32 %v596, %v134
    %v601 = vmul.f32 %v599, %v134
    %v602 = vadd.f32 %v600, 1e-06
    %v603 = vadd.f32 %v601, 1e-06
    %v604 = vrsqrt.pop %v602
    %v605 = vmul.f32 %v604, %v602
    %v606 = vmul.f32 %v605, %v604
    %v607 = vmul.f32 0.5, %v606
    %v608 = vsub.f32 1.5, %v607
    %v609 = vmul.f32 %v604, %v608
    %vm610 = vweird.f32 %v602
    %vm611 = vweird.f32 %v604
    %vm612 = vmor %vm610, %vm611
    %v613 = vsel %vm612, %v604, %v609
    %v614 = vrsqrt.pop %v603
    %v615 = vmul.f32 %v614, %v603
    %v616 = vmul.f32 %v615, %v614
    %v617 = vmul.f32 0.5, %v616
    %v618 = vsub.f32 1.5, %v617
    %v619 = vmul.f32 %v614, %v618
    %vm620 = vweird.f32 %v603
    %vm621 = vweird.f32 %v614
    %vm622 = vmor %vm620, %vm621
    %v623 = vsel %vm622, %v614, %v619
    %v624 = vmul.f32 %v590, %v613
    %v625 = vmul.f32 %v591, %v623
    %v627 = vsel %vm121, %v624, 0
    %v630 = vsel %vm121, %v625, 0
    %632 = vmatpush.msra.mxu0 0.0
    %633 = vmatpush.msra.mxu0 0.0
    %634 = vmatpush.msra.mxu0 0.0
    %635 = vmatpush.msra.mxu0 0.0
    %636 = vmatpush.msra.mxu0 0.0
    %637 = vmatpush.msra.mxu0 0.0
    %638 = vmatpush.msra.mxu0 0.0
    %639 = vmatpush.msra.mxu0 0.0
    %640 = vmatpush.msra.mxu0 0.0
    %641 = vmatpush.msra.mxu0 0.0
    %642 = vmatpush.msra.mxu0 0.0
    %643 = vmatpush.msra.mxu0 0.0
    %644 = vmatpush.msra.mxu0 %v100
    %645 = vmatpush.msra.mxu0 %v97
    %646 = vmatpush.msra.mxu0 %v94
    %647 = vmatpush.msra.mxu0 %v91
    %648 = vmatmul.f32.gmra.mxu0 %v627
    %v649 = vpop.f32.mrf.mxu0
    %v650 = vadd.f32 0.0, %v649
    %651 = vmatmul.f32.gmra.mxu0 %v630
    %v652 = vpop.f32.mrf.mxu0
    %v653 = vadd.f32 0.0, %v652
    %654 = vdwg.mxu0
    %v655 = vxor.u32 %v650, 2147483648
    %v656 = vxor.u32 %v653, 2147483648
    %v657 = vmul.f32 %v655, 1.442695
    %v658 = vpow.pop %v657
    %v659 = vmul.f32 %v656, 1.442695
    %v660 = vpow.pop %v659
    %v661 = vadd.f32 %v658, 1.0
    %v662 = vadd.f32 %v660, 1.0
    %v663 = vrcp.pop %v661
    %v664 = vmul.f32 %v661, %v663
    %v665 = vsub.f32 1.0, %v664
    %v666 = vmul.f32 %v663, %v665
    %v667 = vadd.f32 %v663, %v666
    %vm668 = vweird.f32 %v661
    %vm669 = vweird.f32 %v663
    %vm670 = vmor %vm668, %vm669
    %v671 = vsel %vm670, %v663, %v667
    %v672 = vand.u32 2147483647, %v661
    %vm673 = vcmp.eq.f32.partialorder %v672, 8.507059e+37
    %v674 = vand.u32 %v661, 2147483648
    %v675 = vor.u32 1.1754944e-38, %v674
    %v676 = vsel %vm673, %v675, %v671
    %v677 = vmul.f32 1.0, %v676
    %v678 = vrcp.pop %v662
    %v679 = vmul.f32 %v662, %v678
    %v680 = vsub.f32 1.0, %v679
    %v681 = vmul.f32 %v678, %v680
    %v682 = vadd.f32 %v678, %v681
    %vm683 = vweird.f32 %v662
    %vm684 = vweird.f32 %v678
    %vm685 = vmor %vm683, %vm684
    %v686 = vsel %vm685, %v678, %v682
    %v687 = vand.u32 2147483647, %v662
    %vm688 = vcmp.eq.f32.partialorder %v687, 8.507059e+37
    %v689 = vand.u32 %v662, 2147483648
    %v690 = vor.u32 1.1754944e-38, %v689
    %v691 = vsel %vm688, %v690, %v686
    %v692 = vmul.f32 1.0, %v691
    %v693 = vmul.f32 %v650, %v677
    %v694 = vmul.f32 %v653, %v692
    %697 = vrot.lane.b32.xlu0 %v650, 64
    %v698 = vpop.permute.xlu0 %697
    %699 = vrot.lane.b32.xlu0 %v653, 64
    %v700 = vpop.permute.xlu0 %699
    %v703 = vmul.f32 %v693, %v698
    %v704 = vmul.f32 %v694, %v700
    %v705 = vld [vmem:[%s5] sm:$0xff]
    %v706 = vld [vmem:[%s5 + $0x8] sm:$0xff]
    %v707 = vld [vmem:[%s5 + $0x10] sm:$0xff]
    %v708 = vld [vmem:[%s5 + $0x18] sm:$0xff]
    %v709 = vld [vmem:[%s5 + $0x20] sm:$0xff]
    %v710 = vld [vmem:[%s5 + $0x28] sm:$0xff]
    %v711 = vld [vmem:[%s5 + $0x30] sm:$0xff]
    %v712 = vld [vmem:[%s5 + $0x38] sm:$0xff]
    %v714 = vsel %vm396, %v703, 0
    %v717 = vsel %vm396, %v704, 0
    %719 = vmatpush.msra.mxu0 0.0
    %720 = vmatpush.msra.mxu0 0.0
    %721 = vmatpush.msra.mxu0 0.0
    %722 = vmatpush.msra.mxu0 0.0
    %723 = vmatpush.msra.mxu0 0.0
    %724 = vmatpush.msra.mxu0 0.0
    %725 = vmatpush.msra.mxu0 0.0
    %726 = vmatpush.msra.mxu0 0.0
    %727 = vmatpush.msra.mxu0 %v712
    %728 = vmatpush.msra.mxu0 %v711
    %729 = vmatpush.msra.mxu0 %v710
    %730 = vmatpush.msra.mxu0 %v709
    %731 = vmatpush.msra.mxu0 %v708
    %732 = vmatpush.msra.mxu0 %v707
    %733 = vmatpush.msra.mxu0 %v706
    %734 = vmatpush.msra.mxu0 %v705
    %735 = vmatmul.f32.gmra.mxu0 %v714
    %v736 = vpop.f32.mrf.mxu0
    %v737 = vadd.f32 0.0, %v736
    %738 = vmatmul.f32.gmra.mxu0 %v717
    %v739 = vpop.f32.mrf.mxu0
    %v740 = vadd.f32 0.0, %v739
    %741 = vdwg.mxu0
    %v742 = vadd.f32 %v590, %v737
    %v743 = vadd.f32 %v591, %v740
    %744 = vst.msk [vmem:[#allocation10] sm:$0xff] %vm121, %v742
    %745 = vst.msk [vmem:[#allocation10 + $0x8] sm:$0xff] %vm121, %v743
    // Predicated region
    $region42: #{tpu_custom_call.1} parent=1 // pred_check
      _
    $region43: #{tpu_custom_call.1} parent=1 // pred_check_branch
      %747 = sbr.rel (0) target = $region45
    $region44: #{tpu_custom_call.1} parent=1 // pred_region
      %749 = vsyncadd [#allocation4], 0
      %s750 = sshll.u32 [#allocation10], 4
      %s751 = int_to_ptr.vmem [resolvable:$true] %s750
      %s752 = sshll.u32 %s6, 4
      %s753 = int_to_ptr.hbm [resolvable:$true] %s752
      %758 = dma.vmem_to_hbm [thread:$0]  %s751, 256, %s753, [#allocation4], 128, 128, 8
    $region45: #{tpu_custom_call.1} parent=1 // pred_fallthru
      _
    // Predicated region
    $region46: #{tpu_custom_call.1} parent=1 // pred_check
      _
    $region47: #{tpu_custom_call.1} parent=1 // pred_check_branch
      %760 = sbr.rel (0) target = $region49
    $region48: #{tpu_custom_call.1} parent=1 // pred_region
      %762 = dma.done [#allocation4], 256
    $region49: #{tpu_custom_call.1} parent=1 // pred_fallthru
      _
    %763 = vsyncpa [#allocation3], 1
    %764 = vsyncpa [#allocation6], 1
    %765 = vsyncpa [#allocation9], 1
    %766 = vsyncpa [#allocation4], 1

</llo_original>
